<compile_context>
chip_gen: v7x
topology: tpu7x:2x2x1
jax: 0.10.0
libtpu: 0.0.40
codegen_flags: <defaults>
</compile_context>

<pallas_src>
import jax
import jax.numpy as jnp
from jax.experimental import pallas as pl
from jax.experimental.pallas import tpu as pltpu


def _round_up(x: int, m: int) -> int:
    return (x + m - 1) // m * m


def _mlp_layer_kernel(relu_ref, x_ref, w_ref, b_ref, o_ref, acc_ref):
    """One LinearBlock per grid step; activation carried in VMEM scratch.

    relu_ref: (n_blk,) int32 in SMEM (scalar-prefetched)  -- 1 => apply ReLU
    x_ref:    (TM, Fact) f32   padded, flattened input block
    w_ref:    (Kpad, Npad)     layer weight (leading layer dim squeezed)
    b_ref:    (1, Npad) f32    layer bias
    o_ref:    (TM, OutPad) f32 output block (written only on the last layer)
    acc_ref:  (TM, Fact) f32   running activation (VMEM scratch)
    """
    layer = pl.program_id(1)
    last = pl.num_programs(1) - 1
    kpad, npad = w_ref.shape
    tm, fact = acc_ref.shape
    out_pad = o_ref.shape[-1]

    @pl.when(layer == 0)
    def _():
        acc_ref[...] = x_ref[...]

    lhs = acc_ref[:, :kpad]                       # (TM, Kpad) f32
    if w_ref.dtype != jnp.float32:                # bf16 MXU path (pre-cast weights)
        lhs = lhs.astype(w_ref.dtype)
    y = jnp.dot(lhs, w_ref[...], preferred_element_type=jnp.float32)
    y = y + b_ref[...]                            # (1, Npad) broadcast, f32 epilogue

    # ReLU on all-but-last block (flag-driven, so it follows the module config).
    lo = jnp.where(relu_ref[layer] > 0, 0.0, -jnp.inf).astype(jnp.float32)
    y = jnp.maximum(y, lo)

    @pl.when(layer < last)
    def _():
        acc_ref[:, :npad] = y
        if npad < fact:  # static: keep stale columns zero for the next layer's read
            acc_ref[:, npad:] = jnp.zeros((tm, fact - npad), jnp.float32)

    @pl.when(layer == last)
    def _():
        o_ref[...] = y[:, :out_pad].astype(o_ref.dtype)


def init_mlp_params(key, input_dim, output_dim, dim, n_blk):
    """Synthetic parameters matching MLP.__init__ (norm='none', activ='relu').

    Returns list of (W[(Fin,Fout)], b[(Fout,)], apply_relu) per LinearBlock; W is
    stored transposed vs. PyTorch's (Fout, Fin) so y = x @ W + b.
    """
    assert n_blk >= 2
    dims = [input_dim] + [dim] * (n_blk - 1) + [output_dim]
    params = []
    for i in range(n_blk):
        fin, fout = dims[i], dims[i + 1]
        key, kw, kb = jax.random.split(key, 3)
        bound = 1.0 / (fin ** 0.5)  # PyTorch nn.Linear default init
        w = jax.random.uniform(kw, (fin, fout), jnp.float32, -bound, bound)
        b = jax.random.uniform(kb, (fout,), jnp.float32, -bound, bound)
        params.append((w, b, i < n_blk - 1))  # last block: activation='none'
    return params


def prepare_mlp_params(params, weights_dtype=jnp.float32):
    """Zero-pad layers to a shared (Kpad, Npad), stack, and (optionally) pre-cast.

    Kpad = round_up(max Fin, 128), Npad = round_up(max Fout, 128).  Padding is
    exact: padded input columns, weight rows/cols and bias entries are 0 and
    ReLU(0)=0, so padded lanes stay 0 through the whole stack.
    """
    n_blk = len(params)
    kpad = _round_up(max(w.shape[0] for w, _, _ in params), 128)
    npad = _round_up(max(w.shape[1] for w, _, _ in params), 128)

    w_stack = jnp.zeros((n_blk, kpad, npad), jnp.float32)
    b_stack = jnp.zeros((n_blk, 1, npad), jnp.float32)
    relu = []
    for i, (w, b, r) in enumerate(params):
        fin, fout = w.shape
        w_stack = w_stack.at[i, :fin, :fout].set(w.astype(jnp.float32))
        b_stack = b_stack.at[i, 0, :fout].set(b.astype(jnp.float32))
        relu.append(1 if r else 0)
    w_stack = w_stack.astype(weights_dtype)  # pre-cast once (bf16 MXU option)

    return dict(
        w_stack=w_stack,
        b_stack=b_stack,
        relu_flags=jnp.asarray(relu, jnp.int32),
        fin0=params[0][0].shape[0],
        fout_last=params[-1][0].shape[1],
        kpad=kpad,
        npad=npad,
    )


def mlp_forward(x, prepared):
    """MLP.forward: flatten to (B, -1), run the streamed LinearBlock stack."""
    w_stack = prepared["w_stack"]
    b_stack = prepared["b_stack"]
    relu_flags = prepared["relu_flags"]
    fin0, fout_last = prepared["fin0"], prepared["fout_last"]
    kpad, npad = prepared["kpad"], prepared["npad"]
    n_blk = w_stack.shape[0]
    fact = max(kpad, npad)                 # activation-carry width
    out_pad = _round_up(fout_last, 128)    # lane-dense output padding only

    B = x.shape[0]
    h = x.reshape(B, -1).astype(jnp.float32)
    assert h.shape[1] == fin0, f"flattened input dim {h.shape[1]} != {fin0}"

    # Batch tiling: multiple of 8 sublanes, up to 256 rows per tile (MXU-native M).
    tm = min(256, _round_up(max(B, 8), 8))
    b_pad = _round_up(max(B, 8), tm)
    nb = b_pad // tm

    x_pad = jnp.zeros((b_pad, fact), jnp.float32).at[:B, :fin0].set(h)

    # VMEM budget: double-buffered streamed blocks + the resident activation carry.
    w_itemsize = jnp.dtype(w_stack.dtype).itemsize
    per_step = (2 * (tm * fact * 4 + kpad * npad * w_itemsize + npad * 4
                     + tm * out_pad * 4) + tm * fact * 4)
    vmem_limit = int(min(max(2 * per_step, 16 << 20), 64 << 20))

    flops = 2 * b_pad * kpad * npad * n_blk
    bytes_accessed = int(x_pad.size * 4 + nb * (w_stack.nbytes + b_stack.nbytes)
                         + b_pad * out_pad * 4)

    grid_spec = pltpu.PrefetchScalarGridSpec(
        num_scalar_prefetch=1,              # relu_flags -> SMEM
        grid=(nb, n_blk),                   # (batch tiles, layers)
        in_specs=[
            pl.BlockSpec((tm, fact), lambda b, l, flags: (b, 0)),
            pl.BlockSpec((None, kpad, npad), lambda b, l, flags: (l, 0, 0)),
            pl.BlockSpec((None, 1, npad), lambda b, l, flags: (l, 0, 0)),
        ],
        out_specs=pl.BlockSpec((tm, out_pad), lambda b, l, flags: (b, 0)),
        scratch_shapes=[pltpu.VMEM((tm, fact), jnp.float32)],
    )

    out = pl.pallas_call(
        _mlp_layer_kernel,
        out_shape=jax.ShapeDtypeStruct((b_pad, out_pad), jnp.float32),
        grid_spec=grid_spec,
        compiler_params=pltpu.CompilerParams(
            dimension_semantics=("parallel", "arbitrary"),
            vmem_limit_bytes=vmem_limit),
        cost_estimate=pl.CostEstimate(
            flops=flops, transcendentals=0, bytes_accessed=bytes_accessed),
    )(relu_flags, x_pad, w_stack, b_stack)

    return out[:B, :fout_last]


if __name__ == "__main__":
    key = jax.random.PRNGKey(0)
    key, kx = jax.random.split(key)

    # MUNIT-style style-code input: (B, input_dim, 1, 1) -> flattened (B, input_dim).
    # output_dim > dim so Kpad != Npad (exercises the asymmetric-padding path).
    B, input_dim, output_dim, dim, n_blk = 2, 8, 160, 32, 3
    x = jax.random.normal(kx, (B, input_dim, 1, 1), jnp.float32)

    params = init_mlp_params(key, input_dim, output_dim, dim, n_blk)

    # Plain-JAX reference (same math as the PyTorch module with norm='none').
    h_ref = x.reshape(B, -1).astype(jnp.float32)
    for w, b, relu in params:
        h_ref = h_ref @ w + b
        if relu:
            h_ref = jnp.maximum(h_ref, 0.0)

    # f32 path (exact module numerics).
    prepared_f32 = prepare_mlp_params(params, weights_dtype=jnp.float32)
    out_f32 = jax.block_until_ready(mlp_forward(x, prepared_f32))
    assert out_f32.shape == (B, output_dim)
    assert jnp.allclose(out_f32, h_ref, atol=1e-5, rtol=1e-5)

    # bf16-weight path (pre-cast weights, f32 accumulate + f32 epilogue).
    prepared_bf16 = prepare_mlp_params(params, weights_dtype=jnp.bfloat16)
    out_bf16 = jax.block_until_ready(mlp_forward(x, prepared_bf16))
    assert out_bf16.shape == (B, output_dim)
    assert jnp.allclose(out_bf16, h_ref, atol=5e-2, rtol=5e-2)

    print("KERNEL_OK")
</pallas_src>

<mosaic_0001>
module attributes {stable_mosaic.version = 11 : i64} {
  func.func @_mlp_layer_kernel(%arg0: i32, %arg1: i32, %arg2: memref<3xi32, #tpu.memory_space<smem>>, %arg3: memref<8x256xf32, #tpu.memory_space<vmem>>, %arg4: memref<1x128x256xf32, #tpu.memory_space<vmem>>, %arg5: memref<1x1x256xf32, #tpu.memory_space<vmem>>, %arg6: memref<8x256xf32, #tpu.memory_space<vmem>>, %arg7: memref<8x256xf32, #tpu.memory_space<vmem>>) attributes {dimension_semantics = [#tpu.dimension_semantics<parallel>, #tpu.dimension_semantics<arbitrary>], iteration_bounds = array<i64: 1, 3>, scalar_prefetch = 1 : i64, scratch_operands = 1 : i64, tpu.core_type = #tpu.core_type<tc>, window_params = [{transform_indices = @transform_0, window_bounds = array<i64: 8, 256>}, {transform_indices = @transform_1, window_bounds = array<i64: 1, 128, 256>}, {transform_indices = @transform_2, window_bounds = array<i64: 1, 1, 256>}, {transform_indices = @transform_3, window_bounds = array<i64: 8, 256>}]} {
    %c0_i32 = arith.constant 0 : i32
    %0 = arith.cmpi eq, %arg1, %c0_i32 : i32
    %1 = arith.extui %0 : i1 to i32
    %c0_i32_0 = arith.constant 0 : i32
    %2 = arith.cmpi ne, %1, %c0_i32_0 : i32
    scf.if %2 {
      %c0_14 = arith.constant 0 : index
      %c0_15 = arith.constant 0 : index
      %23 = vector.load %arg3[%c0_14, %c0_15] : memref<8x256xf32, #tpu.memory_space<vmem>>, vector<8x256xf32>
      %c0_16 = arith.constant 0 : index
      %c0_17 = arith.constant 0 : index
      %24 = vector.load %arg7[%c0_16, %c0_17] : memref<8x256xf32, #tpu.memory_space<vmem>>, vector<8x256xf32>
      tpu.vector_store %arg7[%c0_16, %c0_17], %23 {strides = array<i32>} : memref<8x256xf32, #tpu.memory_space<vmem>>, vector<8x256xf32>,
    } else {
    }
    %c0 = arith.constant 0 : index
    %c0_1 = arith.constant 0 : index
    %3 = vector.load %arg7[%c0, %c0_1] : memref<8x256xf32, #tpu.memory_space<vmem>>, vector<8x128xf32>
    %c0_2 = arith.constant 0 : index
    %c0_3 = arith.constant 0 : index
    %c0_4 = arith.constant 0 : index
    %4 = vector.load %arg4[%c0_2, %c0_3, %c0_4] : memref<1x128x256xf32, #tpu.memory_space<vmem>>, vector<1x128x256xf32>
    %5 = vector.shape_cast %4 : vector<1x128x256xf32> to vector<128x256xf32>
    %cst = arith.constant dense<0.000000e+00> : vector<8x256xf32>
    %6 = tpu.matmul %3, %5, %cst {dimension_numbers = #tpu.dot_dimension_numbers<[1], [0], [0], [1], [0, 0, 1, 1], [], []>} : vector<8x128xf32>, vector<128x256xf32>, vector<8x256xf32> -> vector<8x256xf32>
    %c0_5 = arith.constant 0 : index
    %c0_6 = arith.constant 0 : index
    %c0_7 = arith.constant 0 : index
    %7 = vector.load %arg5[%c0_5, %c0_6, %c0_7] : memref<1x1x256xf32, #tpu.memory_space<vmem>>, vector<1x1x256xf32>
    %8 = vector.shape_cast %7 : vector<1x1x256xf32> to vector<1x256xf32>
    %9 = vector.broadcast %8 : vector<1x256xf32> to vector<8x256xf32>
    %10 = arith.addf %6, %9 : vector<8x256xf32>
    %11 = arith.index_cast %arg1 : i32 to index
    %12 = memref.load %arg2[%11] : memref<3xi32, #tpu.memory_space<smem>>
    %c0_i32_8 = arith.constant 0 : i32
    %13 = arith.cmpi sgt, %12, %c0_i32_8 : i32
    %cst_9 = arith.constant 0.000000e+00 : f32
    %cst_10 = arith.constant 0xFF800000 : f32
    %14 = arith.select %13, %cst_9, %cst_10 : f32
    %15 = vector.broadcast %14 : f32 to vector<8x256xf32>
    %16 = arith.maximumf %10, %15 : vector<8x256xf32>
    %c2_i32 = arith.constant 2 : i32
    %17 = arith.cmpi slt, %arg1, %c2_i32 : i32
    %18 = arith.extui %17 : i1 to i32
    %c0_i32_11 = arith.constant 0 : i32
    %19 = arith.cmpi ne, %18, %c0_i32_11 : i32
    scf.if %19 {
      %c0_14 = arith.constant 0 : index
      %c0_15 = arith.constant 0 : index
      %23 = vector.load %arg7[%c0_14, %c0_15] : memref<8x256xf32, #tpu.memory_space<vmem>>, vector<8x256xf32>
      tpu.vector_store %arg7[%c0_14, %c0_15], %16 {strides = array<i32>} : memref<8x256xf32, #tpu.memory_space<vmem>>, vector<8x256xf32>,
    } else {
    }
    %c2_i32_12 = arith.constant 2 : i32
    %20 = arith.cmpi eq, %arg1, %c2_i32_12 : i32
    %21 = arith.extui %20 : i1 to i32
    %c0_i32_13 = arith.constant 0 : i32
    %22 = arith.cmpi ne, %21, %c0_i32_13 : i32
    scf.if %22 {
      %c0_14 = arith.constant 0 : index
      %c0_15 = arith.constant 0 : index
      %23 = vector.load %arg6[%c0_14, %c0_15] : memref<8x256xf32, #tpu.memory_space<vmem>>, vector<8x256xf32>
      tpu.vector_store %arg6[%c0_14, %c0_15], %16 {strides = array<i32>} : memref<8x256xf32, #tpu.memory_space<vmem>>, vector<8x256xf32>,
    } else {
    }
    return
  }
  func.func @transform_0(%arg0: i32, %arg1: i32, %arg2: memref<3xi32, #tpu.memory_space<smem>>) -> (i32, i32) {
    %c0_i32 = arith.constant 0 : i32
    %c0_i32_0 = arith.constant 0 : i32
    return %arg0, %c0_i32 : i32, i32
  }
  func.func @transform_1(%arg0: i32, %arg1: i32, %arg2: memref<3xi32, #tpu.memory_space<smem>>) -> (i32, i32, i32) {
    %c0_i32 = arith.constant 0 : i32
    %c0_i32_0 = arith.constant 0 : i32
    %c0_i32_1 = arith.constant 0 : i32
    return %arg1, %c0_i32, %c0_i32_0 : i32, i32, i32
  }
  func.func @transform_2(%arg0: i32, %arg1: i32, %arg2: memref<3xi32, #tpu.memory_space<smem>>) -> (i32, i32, i32) {
    %c0_i32 = arith.constant 0 : i32
    %c0_i32_0 = arith.constant 0 : i32
    %c0_i32_1 = arith.constant 0 : i32
    return %arg1, %c0_i32, %c0_i32_0 : i32, i32, i32
  }
  func.func @transform_3(%arg0: i32, %arg1: i32, %arg2: memref<3xi32, #tpu.memory_space<smem>>) -> (i32, i32) {
    %c0_i32 = arith.constant 0 : i32
    %c0_i32_0 = arith.constant 0 : i32
    return %arg0, %c0_i32 : i32, i32
  }
}

</mosaic_0001>

<llo_original>
// kernel: tpu_custom_call.1
$region0: #{tpu_custom_call.1}
  #allocation0 [shape = 'u32[]', space=smem, size = 0x4, offset = 0x4, fixed_abs, tag = 'smem constant byte address 0x4 - core index']
  #allocation1 [shape = 'u32[144,128]{1,0:T(1,128)}', space=vmem, size = 0x12000, scoped, tag = 'internal scratch']
  #allocation2 [shape = 'f32[8,256]{1,0:T(8,128)}', space=vmem, size = 0x2000, scoped, tag = 'scratch operand']
  #allocation3 [shape = 's32[1]{0}', space=sflag, size = 0x4, scoped, tag = 'scoped memory for tpu_custom_call.1']
  #allocation4 [shape = 'u8[512]{0}', space=smem, size = 0x200, scoped, tag = 'prefetched SMEM operand 0']
  %s0 = inlined_call_operand.hbm [shape: s32[3], index: 0, kind: input, shape index: {}]
  %s1 = inlined_call_operand.hbm [shape: f32[8,256], index: 1, kind: input, shape index: {}]
  %s2 = inlined_call_operand.hbm [shape: f32[3,128,256], index: 2, kind: input, shape index: {}]
  %s3 = inlined_call_operand.vmem [shape: f32[3,1,256], index: 3, kind: input, shape index: {}]
  %s4 = inlined_call_operand.hbm [shape: f32[8,256], index: 4, kind: output, shape index: {}]
  %s5 = sld [smem:[#allocation0]]
  $region65: #{tpu_custom_call.1} parent=0
    _
  %s7 = ssub.s32 1, %s5
  %s8 = scalar_select 0, %s7, %s5
  %10 = dma.hbm_to_smem %s0, 16, [#allocation4], [#allocation3]
  %11 = dma.done [#allocation3], 16
  %12 = sfence
  $region1: #{tpu_custom_call.1} parent=0
    #allocation5 [shape = 'u8[8192]{0}', space=vmem, size = 0x2000, scoped, tag = 'input window, operand 1, single buffered']
    #allocation6 [shape = 's32[2]{0}', space=sflag, size = 0x8, scoped, tag = 'scoped memory for tpu_custom_call.1']
    #allocation7 [shape = 's32[2]{0}', space=sflag, size = 0x8, scoped, tag = 'scoped memory for tpu_custom_call.1']
    #allocation8 [shape = 'u8[262144]{0}', space=vmem, size = 0x40000, scoped, tag = 'input window, operand 2']
    #allocation9 [shape = 's32[2]{0}', space=sflag, size = 0x8, scoped, tag = 'scoped memory for tpu_custom_call.1']
    #allocation10 [shape = 'u8[8192]{0}', space=vmem, size = 0x2000, scoped, tag = 'output window, operand 0, single buffered']
    %13 = vsyncpa [#allocation6], 0
    %14 = vsyncpa [#allocation9], 0
    %s15 = scalar_lea.sflag [#allocation9], 1
    %16 = vsyncpa %s15, 0
    %17 = vsyncpa [#allocation7], 0
    loop: start=0, step=1, limit=5
    $region2: #{tpu_custom_call.1} parent=1 // loop_pre_header
      _
    $region3: #{tpu_custom_call.1} parent=1 // loop_header
      %s19 = sphi 0, %s23
      %p20 = scmp.ge.s32.totalorder %s19, 5
      %s26 = sphi 0, %s38
      %s27 = sphi 0, %s34
      %s28 = sphi 0, %s26
      %s29 = sphi 0, %s27
      %s30 = sphi 0, %s28
      %s31 = sphi 0, %s29
      %s41 = sphi 0, %s43
      %s44 = sphi 0, %s41
      %s45 = sphi 0, %s44
      %s61 = sphi 0, %s45
      %s67 = sphi 0, %s69
      %s70 = sphi 0, %s67
      %s71 = sphi 0, %s70
      %s87 = sphi 0, %s71
      %s93 = sphi 0, %s95
      %s96 = sphi 0, %s93
      %s97 = sphi 0, %s96
      %s113 = sphi 0, %s97
      %s119 = sphi 0, %s121
      %s122 = sphi 0, %s119
      %s123 = sphi 0, %s122
      %s139 = sphi 0, %s123
    $region4: #{tpu_custom_call.1} parent=1 // loop_header_branch
      %22 = sbr.rel (%p20) target = $region8
    $region5: #{tpu_custom_call.1} parent=1 // loop_body
      %s24 = ssub.s32 %s19, 1
      %s25 = ssub.s32 %s19, 2
      %s32 = sadd.s32 1, %s27
      %p33 = scmp.ge.s32.totalorder %s32, 3
      %s34 = scalar_select %p33, 0, %s32
      %s35 = sadd.s32 1, %s26
      %s36 = scalar_select %p33, %s35, %s26
      %p37 = scmp.ge.s32.totalorder %s36, 1
      %s38 = scalar_select %p37, 0, %s36
      %s39 = ssub.s32 %s26, %s38
      %p40 = scmp.eq.s32.totalorder %s39, 0
      %s42 = sadd.s32 %s41, 1
      %s43 = scalar_select %p40, %s41, %s42
      %p46 = pneg %p40
      %p47 = scmp.eq.s32.totalorder %s19, 2
      %p48 = por %p46, %p47
      %p49 = scmp.ne.s32.totalorder %s41, %s44
      %p50 = scmp.eq.s32.totalorder %s19, 0
      %p51 = por %p49, %p50
      %p52 = scmp.ne.s32.totalorder %s41, %s44
      %p53 = scmp.eq.s32.totalorder %s24, 2
      %p54 = por %p52, %p53
      %p55 = scmp.ne.s32.totalorder %s44, %s45
      %p56 = scmp.eq.s32.totalorder %s24, 0
      %p57 = por %p55, %p56
      %p58 = scmp.ne.s32.totalorder %s44, %s45
      %p59 = scmp.eq.s32.totalorder %s25, 2
      %p60 = por %p58, %p59
      %p62 = scmp.ne.s32.totalorder %s45, %s61
      %p63 = scmp.eq.s32.totalorder %s25, 0
      %p64 = por %p62, %p63
      %s65 = ssub.s32 %s27, %s34
      %p66 = scmp.eq.s32.totalorder %s65, 0
      %s68 = sadd.s32 %s67, 1
      %s69 = scalar_select %p66, %s67, %s68
      %p72 = pneg %p66
      %p73 = scmp.eq.s32.totalorder %s19, 2
      %p74 = por %p72, %p73
      %p75 = scmp.ne.s32.totalorder %s67, %s70
      %p76 = scmp.eq.s32.totalorder %s19, 0
      %p77 = por %p75, %p76
      %p78 = scmp.ne.s32.totalorder %s67, %s70
      %p79 = scmp.eq.s32.totalorder %s24, 2
      %p80 = por %p78, %p79
      %p81 = scmp.ne.s32.totalorder %s70, %s71
      %p82 = scmp.eq.s32.totalorder %s24, 0
      %p83 = por %p81, %p82
      %p84 = scmp.ne.s32.totalorder %s70, %s71
      %p85 = scmp.eq.s32.totalorder %s25, 2
      %p86 = por %p84, %p85
      %p88 = scmp.ne.s32.totalorder %s71, %s87
      %p89 = scmp.eq.s32.totalorder %s25, 0
      %p90 = por %p88, %p89
      %s91 = ssub.s32 %s27, %s34
      %p92 = scmp.eq.s32.totalorder %s91, 0
      %s94 = sadd.s32 %s93, 1
      %s95 = scalar_select %p92, %s93, %s94
      %p98 = pneg %p92
      %p99 = scmp.eq.s32.totalorder %s19, 2
      %p100 = por %p98, %p99
      %p101 = scmp.ne.s32.totalorder %s93, %s96
      %p102 = scmp.eq.s32.totalorder %s19, 0
      %p103 = por %p101, %p102
      %p104 = scmp.ne.s32.totalorder %s93, %s96
      %p105 = scmp.eq.s32.totalorder %s24, 2
      %p106 = por %p104, %p105
      %p107 = scmp.ne.s32.totalorder %s96, %s97
      %p108 = scmp.eq.s32.totalorder %s24, 0
      %p109 = por %p107, %p108
      %p110 = scmp.ne.s32.totalorder %s96, %s97
      %p111 = scmp.eq.s32.totalorder %s25, 2
      %p112 = por %p110, %p111
      %p114 = scmp.ne.s32.totalorder %s97, %s113
      %p115 = scmp.eq.s32.totalorder %s25, 0
      %p116 = por %p114, %p115
      %s117 = ssub.s32 %s26, %s38
      %p118 = scmp.eq.s32.totalorder %s117, 0
      %s120 = sadd.s32 %s119, 1
      %s121 = scalar_select %p118, %s119, %s120
      %p124 = pneg %p118
      %p125 = scmp.eq.s32.totalorder %s19, 2
      %p126 = por %p124, %p125
      %p127 = scmp.ne.s32.totalorder %s119, %s122
      %p128 = scmp.eq.s32.totalorder %s19, 0
      %p129 = por %p127, %p128
      %p130 = scmp.ne.s32.totalorder %s119, %s122
      %p131 = scmp.eq.s32.totalorder %s24, 2
      %p132 = por %p130, %p131
      %p133 = scmp.ne.s32.totalorder %s122, %s123
      %p134 = scmp.eq.s32.totalorder %s24, 0
      %p135 = por %p133, %p134
      %p136 = scmp.ne.s32.totalorder %s122, %s123
      %p137 = scmp.eq.s32.totalorder %s25, 2
      %p138 = por %p136, %p137
      %p140 = scmp.ne.s32.totalorder %s123, %s139
      %p141 = scmp.eq.s32.totalorder %s25, 0
      %p142 = por %p140, %p141
      %p143 = scmp.le.s32.totalorder 1, %s19
      %p144 = scmp.lt.s32.totalorder %s19, 4
      %p145 = pnand %p143, %p144
      %p146 = pneg %p145
      // Predicated region
      $region9: #{tpu_custom_call.1} parent=5 // pred_check
        _
      $region10: #{tpu_custom_call.1} parent=5 // pred_check_branch
        %148 = sbr.rel (%p145) target = $region12
      $region11: #{tpu_custom_call.1} parent=5 // pred_region
        %s149 = ssub.s32 %s19, 1
        // Predicated region
        $region13: #{tpu_custom_call.1} parent=11 // pred_check
          %p150 = pneg %p57
        $region14: #{tpu_custom_call.1} parent=11 // pred_check_branch
          %152 = sbr.rel (%p150) target = $region16
        $region15: #{tpu_custom_call.1} parent=11 // pred_region
          %s154 = ssub.s32 256, 256
          %155 = vsyncadd [#allocation6], %s154
          %s156 = smul.addr %s28, 2
          %s157 = smul.addr %s156, 128
          %s158 = scalar_lea.hbm %s1, %s157
          %s160 = sshll.u32 [#allocation5], 4
          %s161 = int_to_ptr.vmem [resolvable:$true] %s160
          %163 = dma.hbm_to_vmem [thread:$0]  %s158, 256, %s161, [#allocation6]
        $region16: #{tpu_custom_call.1} parent=11 // pred_fallthru
          _
      $region12: #{tpu_custom_call.1} parent=5 // pred_fallthru
        _
      %p164 = scmp.lt.s32.totalorder %s19, 3
      // Predicated region
      $region17: #{tpu_custom_call.1} parent=5 // pred_check
        %p165 = pneg %p164
      $region18: #{tpu_custom_call.1} parent=5 // pred_check_branch
        %167 = sbr.rel (%p165) target = $region20
      $region19: #{tpu_custom_call.1} parent=5 // pred_region
        // Predicated region
        $region21: #{tpu_custom_call.1} parent=19 // pred_check
          %p168 = pneg %p77
        $region22: #{tpu_custom_call.1} parent=19 // pred_check_branch
          %170 = sbr.rel (%p168) target = $region24
        $region23: #{tpu_custom_call.1} parent=19 // pred_region
          %s171 = sand.u32 %s67, 1
          %s172 = scalar_lea.sflag [#allocation9], %s171
          %s173 = sand.u32 %s67, 1
          %s174 = smul.addr %s173, 256
          %s175 = scalar_lea.vmem [#allocation8], %s174
          %s177 = ssub.s32 4096, 4096
          %178 = vsyncadd %s172, %s177
          %s179 = smul.addr %s27, 32
          %s180 = smul.addr %s179, 128
          %s181 = scalar_lea.hbm %s2, %s180
          %s182 = sshll.u32 %s175, 4
          %s183 = int_to_ptr.vmem [resolvable:$true] %s182
          %188 = dma.hbm_to_vmem [thread:$0]  %s181, 4096, %s183, %s172, 256, 256, 16
        $region24: #{tpu_custom_call.1} parent=19 // pred_fallthru
          _
        // Predicated region
        $region25: #{tpu_custom_call.1} parent=19 // pred_check
          %p189 = pneg %p103
        $region26: #{tpu_custom_call.1} parent=19 // pred_check_branch
          %191 = sbr.rel (%p189) target = $region28
        $region27: #{tpu_custom_call.1} parent=19 // pred_region
          %p192 = scmp.lt.s32.totalorder %s27, 2
          %s193 = scalar_select %p192, %s27, 2
          %s194 = smul.addr %s193, 2
          %s195 = scalar_lea.vmem %s3, %s194
        $region28: #{tpu_custom_call.1} parent=19 // pred_fallthru
          _
      $region20: #{tpu_custom_call.1} parent=5 // pred_fallthru
        _
      %p196 = scmp.le.s32.totalorder 1, %s19
      %p197 = scmp.lt.s32.totalorder %s19, 4
      %p198 = pnand %p196, %p197
      %p199 = pneg %p198
      // Predicated region
      $region29: #{tpu_custom_call.1} parent=5 // pred_check
        _
      $region30: #{tpu_custom_call.1} parent=5 // pred_check_branch
        %201 = sbr.rel (%p198) target = $region32
      $region31: #{tpu_custom_call.1} parent=5 // pred_region
        %s202 = ssub.s32 %s19, 1
        // Predicated region
        $region33: #{tpu_custom_call.1} parent=31 // pred_check
          %p203 = pneg %p57
        $region34: #{tpu_custom_call.1} parent=31 // pred_check_branch
          %205 = sbr.rel (%p203) target = $region36
        $region35: #{tpu_custom_call.1} parent=31 // pred_region
          %206 = dma.done [#allocation6], 256
        $region36: #{tpu_custom_call.1} parent=31 // pred_fallthru
          _
        %s207 = sand.u32 %s70, 1
        %s208 = scalar_lea.sflag [#allocation9], %s207
        %s209 = sand.u32 %s70, 1
        %s210 = smul.addr %s209, 256
        %s211 = scalar_lea.vmem [#allocation8], %s210
        // Predicated region
        $region37: #{tpu_custom_call.1} parent=31 // pred_check
          %p212 = pneg %p83
        $region38: #{tpu_custom_call.1} parent=31 // pred_check_branch
          %214 = sbr.rel (%p212) target = $region40
        $region39: #{tpu_custom_call.1} parent=31 // pred_region
          %215 = dma.done %s208, 4096
        $region40: #{tpu_custom_call.1} parent=31 // pred_fallthru
          _
        %p216 = pneg %p57
        %p217 = pneg %p54
        %s218 = sand.u32 %s70, 1
        %s219 = scalar_lea.sflag [#allocation9], %s218
        %s220 = sand.u32 %s70, 1
        %s221 = smul.addr %s220, 256
        %s222 = scalar_lea.vmem [#allocation8], %s221
        %p223 = pneg %p83
        %p224 = pneg %p80
        %p225 = scmp.lt.s32.totalorder %s29, 2
        %s226 = scalar_select %p225, %s29, 2
        %s227 = smul.addr %s226, 2
        %s228 = scalar_lea.vmem %s3, %s227
        %p229 = pneg %p109
        %p230 = pneg %p106
        %p231 = pneg %p135
        %p232 = pneg %p132
        %p233 = scmp.lt.s32.totalorder %s29, 2
        %s234 = scalar_select %p233, %s29, 2
        %s235 = smul.addr %s234, 2
        %s236 = scalar_lea.vmem %s3, %s235
        %p237 = scmp.eq.s32.totalorder %s29, 0
        // Predicated region
        $region41: #{tpu_custom_call.1} parent=31 // pred_check
          %p238 = pneg %p237
        $region42: #{tpu_custom_call.1} parent=31 // pred_check_branch
          %240 = sbr.rel (%p238) target = $region44
        $region43: #{tpu_custom_call.1} parent=31 // pred_region
          %v241 = vld [vmem:[#allocation5] sm:$0xff]
          %v242 = vld [vmem:[#allocation5 + $0x8] sm:$0xff]
          %243 = vst [vmem:[#allocation2] sm:$0xff] %v241
          %244 = vst [vmem:[#allocation2 + $0x8] sm:$0xff] %v242
        $region44: #{tpu_custom_call.1} parent=31 // pred_fallthru
          _
        %v245 = vld [vmem:[#allocation2] sm:$0xff]
        %v246 = vld [vmem:[%s211] sm:$0xff]
        %v247 = vld [vmem:[%s211 + $0x8] sm:$0xff]
        %v248 = vld [vmem:[%s211 + $0x10] sm:$0xff]
        %v249 = vld [vmem:[%s211 + $0x18] sm:$0xff]
        %v250 = vld [vmem:[%s211 + $0x20] sm:$0xff]
        %v251 = vld [vmem:[%s211 + $0x28] sm:$0xff]
        %v252 = vld [vmem:[%s211 + $0x30] sm:$0xff]
        %v253 = vld [vmem:[%s211 + $0x38] sm:$0xff]
        %v254 = vld [vmem:[%s211 + $0x40] sm:$0xff]
        %v255 = vld [vmem:[%s211 + $0x48] sm:$0xff]
        %v256 = vld [vmem:[%s211 + $0x50] sm:$0xff]
        %v257 = vld [vmem:[%s211 + $0x58] sm:$0xff]
        %v258 = vld [vmem:[%s211 + $0x60] sm:$0xff]
        %v259 = vld [vmem:[%s211 + $0x68] sm:$0xff]
        %v260 = vld [vmem:[%s211 + $0x70] sm:$0xff]
        %v261 = vld [vmem:[%s211 + $0x78] sm:$0xff]
        %v262 = vld [vmem:[%s211 + $0x80] sm:$0xff]
        %v263 = vld [vmem:[%s211 + $0x88] sm:$0xff]
        %v264 = vld [vmem:[%s211 + $0x90] sm:$0xff]
        %v265 = vld [vmem:[%s211 + $0x98] sm:$0xff]
        %v266 = vld [vmem:[%s211 + $0xa0] sm:$0xff]
        %v267 = vld [vmem:[%s211 + $0xa8] sm:$0xff]
        %v268 = vld [vmem:[%s211 + $0xb0] sm:$0xff]
        %v269 = vld [vmem:[%s211 + $0xb8] sm:$0xff]
        %v270 = vld [vmem:[%s211 + $0xc0] sm:$0xff]
        %v271 = vld [vmem:[%s211 + $0xc8] sm:$0xff]
        %v272 = vld [vmem:[%s211 + $0xd0] sm:$0xff]
        %v273 = vld [vmem:[%s211 + $0xd8] sm:$0xff]
        %v274 = vld [vmem:[%s211 + $0xe0] sm:$0xff]
        %v275 = vld [vmem:[%s211 + $0xe8] sm:$0xff]
        %v276 = vld [vmem:[%s211 + $0xf0] sm:$0xff]
        %v277 = vld [vmem:[%s211 + $0xf8] sm:$0xff]
        %v278 = vld [vmem:[%s236] sm:$0x3]
        %v280 = vlaneseq
        %v281 = vshrl.u32 %v280, 7
        %v282 = vsub.s32 0, %v281
        %v283 = vrot.slane %v278, %v282
        %v284 = vlaneseq
        %v285 = vshrl.u32 %v284, 7
        %v286 = vsub.s32 1, %v285
        %v287 = vrot.slane %v278, %v286
        %290 = vmatprep.subr.mxu0 %v247
        %291 = vmatpush1.msra.mxu0 %v246
        %292 = vmatprep.subr.mxu0 %v249
        %293 = vmatpush1.msra.mxu0 %v248
        %294 = vmatprep.subr.mxu0 %v251
        %295 = vmatpush1.msra.mxu0 %v250
        %296 = vmatprep.subr.mxu0 %v253
        %297 = vmatpush1.msra.mxu0 %v252
        %298 = vmatprep.subr.mxu0 %v255
        %299 = vmatpush1.msra.mxu0 %v254
        %300 = vmatprep.subr.mxu0 %v257
        %301 = vmatpush1.msra.mxu0 %v256
        %302 = vmatprep.subr.mxu0 %v259
        %303 = vmatpush1.msra.mxu0 %v258
        %304 = vmatprep.subr.mxu0 %v261
        %305 = vmatpush1.msra.mxu0 %v260
        %306 = vmatprep.subr.mxu0 %v263
        %307 = vmatpush1.msra.mxu0 %v262
        %308 = vmatprep.subr.mxu0 %v265
        %309 = vmatpush1.msra.mxu0 %v264
        %310 = vmatprep.subr.mxu0 %v267
        %311 = vmatpush1.msra.mxu0 %v266
        %312 = vmatprep.subr.mxu0 %v269
        %313 = vmatpush1.msra.mxu0 %v268
        %314 = vmatprep.subr.mxu0 %v271
        %315 = vmatpush1.msra.mxu0 %v270
        %316 = vmatprep.subr.mxu0 %v273
        %317 = vmatpush1.msra.mxu0 %v272
        %318 = vmatprep.subr.mxu0 %v275
        %319 = vmatpush1.msra.mxu0 %v274
        %320 = vmatprep.subr.mxu0 %v277
        %321 = vmatpush1.msra.mxu0 %v276
        %322 = vmatprep.subr.mxu0 0.0
        %323 = vmatpush1.msra.mxu0 0.0
        %324 = vmatprep.subr.mxu0 0.0
        %325 = vmatpush1.msra.mxu0 0.0
        %326 = vmatprep.subr.mxu0 0.0
        %327 = vmatpush1.msra.mxu0 0.0
        %328 = vmatprep.subr.mxu0 0.0
        %329 = vmatpush1.msra.mxu0 0.0
        %330 = vmatprep.subr.mxu0 0.0
        %331 = vmatpush1.msra.mxu0 0.0
        %332 = vmatprep.subr.mxu0 0.0
        %333 = vmatpush1.msra.mxu0 0.0
        %334 = vmatprep.subr.mxu0 0.0
        %335 = vmatpush1.msra.mxu0 0.0
        %336 = vmatprep.subr.mxu0 0.0
        %337 = vmatpush1.msra.mxu0 0.0
        %338 = vmatprep.subr.mxu0 0.0
        %339 = vmatpush1.msra.mxu0 0.0
        %340 = vmatprep.subr.mxu0 0.0
        %341 = vmatpush1.msra.mxu0 0.0
        %342 = vmatprep.subr.mxu0 0.0
        %343 = vmatpush1.msra.mxu0 0.0
        %344 = vmatprep.subr.mxu0 0.0
        %345 = vmatpush1.msra.mxu0 0.0
        %346 = vmatprep.subr.mxu0 0.0
        %347 = vmatpush1.msra.mxu0 0.0
        %348 = vmatprep.subr.mxu0 0.0
        %349 = vmatpush1.msra.mxu0 0.0
        %350 = vmatprep.subr.mxu0 0.0
        %351 = vmatpush1.msra.mxu0 0.0
        %352 = vmatprep.subr.mxu0 0.0
        %353 = vmatpush1.msra.mxu0 0.0
        %354 = vmatprep.mubr.f32.mxu0 0.0
        %355 = vmatmul.mubr.f32.gmra.mrb[0].mxu0 %v245
        %v356 = vpop.f32.mrb[0].mxu0
        %v357 = vadd.f32 %v283, %v356
        %v358 = vpop.f32.mrb[0].mxu0
        %v359 = vadd.f32 %v287, %v358
        %360 = vdwg.mxu0
        %s361 = sld [smem:[#allocation4 + %s29]]
        %p362 = scmp.gt.s32.totalorder %s361, 0
        %s363 = scalar_select %p362, 0.0, -inf
        %v364 = vstv %s363
        %v365 = vmax.f32 %v357, %v364
        %v366 = vmax.f32 %v359, %v364
        %p367 = scmp.lt.s32.totalorder %s29, 2
        // Predicated region
        $region45: #{tpu_custom_call.1} parent=31 // pred_check
          %p368 = pneg %p367
        $region46: #{tpu_custom_call.1} parent=31 // pred_check_branch
          %370 = sbr.rel (%p368) target = $region48
        $region47: #{tpu_custom_call.1} parent=31 // pred_region
          %371 = vst [vmem:[#allocation2] sm:$0xff] %v365
          %372 = vst [vmem:[#allocation2 + $0x8] sm:$0xff] %v366
        $region48: #{tpu_custom_call.1} parent=31 // pred_fallthru
          _
        %p373 = scmp.eq.s32.totalorder %s29, 2
        // Predicated region
        $region49: #{tpu_custom_call.1} parent=31 // pred_check
          %p374 = pneg %p373
        $region50: #{tpu_custom_call.1} parent=31 // pred_check_branch
          %376 = sbr.rel (%p374) target = $region52
        $region51: #{tpu_custom_call.1} parent=31 // pred_region
          %377 = vst [vmem:[#allocation10] sm:$0xff] %v365
          %378 = vst [vmem:[#allocation10 + $0x8] sm:$0xff] %v366
        $region52: #{tpu_custom_call.1} parent=31 // pred_fallthru
          _
        // Predicated region
        $region53: #{tpu_custom_call.1} parent=31 // pred_check
          %p379 = pneg %p132
        $region54: #{tpu_custom_call.1} parent=31 // pred_check_branch
          %381 = sbr.rel (%p379) target = $region56
        $region55: #{tpu_custom_call.1} parent=31 // pred_region
          %s383 = ssub.s32 256, 256
          %384 = vsyncadd [#allocation7], %s383
          %s385 = smul.addr %s28, 2
          %s386 = smul.addr %s385, 128
          %s387 = scalar_lea.hbm %s4, %s386
          %s389 = sshll.u32 [#allocation10], 4
          %s390 = int_to_ptr.vmem [resolvable:$true] %s389
          %392 = dma.vmem_to_hbm [thread:$0]  %s390, 256, %s387, [#allocation7]
        $region56: #{tpu_custom_call.1} parent=31 // pred_fallthru
          _
        // Predicated region
        $region57: #{tpu_custom_call.1} parent=31 // pred_check
          %p393 = pneg %p132
        $region58: #{tpu_custom_call.1} parent=31 // pred_check_branch
          %395 = sbr.rel (%p393) target = $region60
        $region59: #{tpu_custom_call.1} parent=31 // pred_region
          %396 = dma.done [#allocation7], 256
        $region60: #{tpu_custom_call.1} parent=31 // pred_fallthru
          _
      $region32: #{tpu_custom_call.1} parent=5 // pred_fallthru
        _
      %p397 = scmp.le.s32.totalorder 2, %s19
      // Predicated region
      $region61: #{tpu_custom_call.1} parent=5 // pred_check
        %p398 = pneg %p397
      $region62: #{tpu_custom_call.1} parent=5 // pred_check_branch
        %400 = sbr.rel (%p398) target = $region64
      $region63: #{tpu_custom_call.1} parent=5 // pred_region
        %s401 = ssub.s32 %s19, 2
      $region64: #{tpu_custom_call.1} parent=5 // pred_fallthru
        _
    $region6: #{tpu_custom_call.1} parent=1 // loop_footer
      %s23 = sadd.s32 1, %s19
    $region7: #{tpu_custom_call.1} parent=1 // loop_footer_branch
      %18 = sbr.rel target = $region3
    $region8: #{tpu_custom_call.1} parent=1 // loop_exit
      _
    %402 = vsyncpa [#allocation6], 1
    %s403 = scalar_lea.sflag [#allocation6], 1
    %404 = vsyncpa %s403, 1
    %405 = vsyncpa [#allocation9], 1
    %s406 = scalar_lea.sflag [#allocation9], 1
    %407 = vsyncpa %s406, 1
    %408 = vsyncpa [#allocation7], 1
    %s409 = scalar_lea.sflag [#allocation7], 1
    %410 = vsyncpa %s409, 1

</llo_original>
